<compile_context>
chip_gen: v5e
topology: v5e:2x2
jax: 0.10.0
libtpu: 0.0.40
codegen_flags: <defaults>
</compile_context>

<pallas_src>
import jax
import jax.numpy as jnp
from jax import lax
from jax.experimental import pallas as pl
from jax.experimental.pallas import tpu as pltpu


def _round_up(x, m):
    return (x + m - 1) // m * m


def init_params(key, data_size, hidden_size, output_size):
    """Deterministic init matching nn.Linear's U(-1/sqrt(fan_in), 1/sqrt(fan_in)).
    Weights kept in the PyTorch (out, in) layout."""
    k1, k2, k3, k4 = jax.random.split(key, 4)
    in1 = data_size + hidden_size
    b1 = 1.0 / jnp.sqrt(jnp.float32(in1))
    b2 = 1.0 / jnp.sqrt(jnp.float32(hidden_size))
    return {
        "w_i2h": jax.random.uniform(k1, (hidden_size, in1), jnp.float32, -b1, b1),
        "b_i2h": jax.random.uniform(k2, (hidden_size,), jnp.float32, -b1, b1),
        "w_h2o": jax.random.uniform(k3, (output_size, hidden_size), jnp.float32, -b2, b2),
        "b_h2o": jax.random.uniform(k4, (output_size,), jnp.float32, -b2, b2),
    }


def prepare_params(params, data_size, compute_dtype=jnp.bfloat16):
    """One-time layout prep (off the per-call critical path):
      * split the i2h weight into the data part W_d (hoisted out of the recurrence)
        and the hidden part W_h (the only matmul left on the serial path),
      * transpose to (in, out) and zero-pad every feature axis to 128 lanes,
      * store MXU operands in compute_dtype (bf16 default for v6e/v7x); biases stay
        f32 (f32 accumulation / elementwise).
    The zero padding keeps the padded hidden lanes exactly 0 through the whole
    recurrence (zero weight rows/cols + zero bias pad entries), which the kernel
    relies on."""
    H = params["b_i2h"].shape[0]
    O = params["b_h2o"].shape[0]
    D = data_size
    D_pad, H_pad, O_pad = _round_up(D, 128), _round_up(H, 128), _round_up(O, 128)

    w_i2h_t = params["w_i2h"].T                                   # (D + H, H) f32
    w_d = jnp.zeros((D_pad, H_pad), compute_dtype).at[:D, :H].set(
        w_i2h_t[:D].astype(compute_dtype))
    w_h = jnp.zeros((H_pad, H_pad), compute_dtype).at[:H, :H].set(
        w_i2h_t[D:].astype(compute_dtype))
    b_i2h = jnp.zeros((1, H_pad), jnp.float32).at[0, :H].set(params["b_i2h"])
    w_h2o = jnp.zeros((H_pad, O_pad), compute_dtype).at[:H, :O].set(
        params["w_h2o"].T.astype(compute_dtype))
    b_h2o = jnp.zeros((1, O_pad), jnp.float32).at[0, :O].set(params["b_h2o"])

    return {
        "w_d": w_d, "w_h": w_h, "b_i2h": b_i2h, "w_h2o": w_h2o, "b_h2o": b_h2o,
        "data_size": D, "hidden_size": H, "output_size": O,
    }


def _matmul_bias(x, w, b):
    """Lane-dense (M, K) @ (K, N) + b Pallas matmul with f32 accumulation.
    K and N must already be multiples of 128; M is padded here.
    TODO(synk): add a K-reduction grid axis if K ever exceeds a few thousand."""
    M, K = x.shape
    N = w.shape[1]
    tm = min(128, _round_up(M, 8))
    M_pad = _round_up(M, tm)
    if M_pad != M:
        x = jnp.pad(x, ((0, M_pad - M), (0, 0)))

    def kernel(x_ref, w_ref, b_ref, o_ref):
        o_ref[...] = (jnp.dot(x_ref[...].astype(w_ref.dtype), w_ref[...],
                              preferred_element_type=jnp.float32)
                      + b_ref[...]).astype(o_ref.dtype)

    out = pl.pallas_call(
        kernel,
        grid=(M_pad // tm,),
        in_specs=[
            pl.BlockSpec((tm, K), lambda i: (i, 0)),
            pl.BlockSpec((K, N), lambda i: (0, 0)),     # resident weight
            pl.BlockSpec((1, N), lambda i: (0, 0)),      # resident bias
        ],
        out_specs=pl.BlockSpec((tm, N), lambda i: (i, 0)),
        out_shape=jax.ShapeDtypeStruct((M_pad, N), jnp.float32),
        compiler_params=pltpu.CompilerParams(
            dimension_semantics=("parallel",),
            vmem_limit_bytes=32 * 1024 * 1024),
    )(x, w, b)
    return out[:M]


def rnn_forward_seq(data_seq, h0, prepped, *, batch_tile=None, time_tile=8):
    """Runs the RNN forward over a whole sequence.

    data_seq: (T, B, data_size)  h0: (B, hidden_size)
    Returns (hidden_seq, output_seq) with shapes (T, B, hidden_size) / (T, B, output_size),
    where step t equals the PyTorch module's forward(data_seq[t], hidden_{t-1}).
    """
    T, B, D = data_seq.shape
    H, O = prepped["hidden_size"], prepped["output_size"]
    D_pad, H_pad = prepped["w_d"].shape
    O_pad = prepped["w_h2o"].shape[1]
    assert D == prepped["data_size"] and h0.shape == (B, H)
    cdt = prepped["w_d"].dtype

    # ---- batch / time padding & tiling -------------------------------------
    B_pad = _round_up(B, 8)                       # (8,128) sublane rule for f32 tiles
    if batch_tile is None:
        cands = [c for c in range(8, min(B_pad, 128) + 1, 8) if B_pad % c == 0]
        bt = cands[-1]
        if bt == B_pad and B_pad >= 16 and len(cands) > 1:
            bt = cands[-2]                        # prefer >=2 tiles: v7x megacore sharding
    else:
        bt = batch_tile
    assert bt % 8 == 0 and B_pad % bt == 0
    nb = B_pad // bt

    tt_sz = max(1, min(time_tile, T))             # recurrence steps per grid step
    T_pad = _round_up(T, tt_sz)
    nt = T_pad // tt_sz

    # ---- hoisted data projection: pre[t] = data[t] @ W_d + b_i2h ------------
    # One big MXU-friendly matmul (M = T*B_pad); data pre-cast to compute dtype
    # in the wrapper so no per-step f32->bf16 cast sits on the serial path.
    data_p = jnp.zeros((T, B_pad, D_pad), cdt).at[:, :B, :D].set(data_seq.astype(cdt))
    pre = _matmul_bias(data_p.reshape(T * B_pad, D_pad),
                       prepped["w_d"], prepped["b_i2h"]).reshape(T, B_pad, H_pad)
    if T_pad != T:
        # Zero-padded trailing steps: hidden just keeps multiplying by W_h there;
        # those rows are sliced off below and never feed back into real steps.
        pre = jnp.pad(pre, ((0, T_pad - T), (0, 0), (0, 0)))

    h0_p = jnp.zeros((B_pad, H_pad), jnp.float32).at[:B, :H].set(h0)

    # ---- recurrent core: only hidden @ W_h stays serialized -----------------
    def kernel(pre_ref, h0_ref, wh_ref, hid_ref, h_sc):
        @pl.when(pl.program_id(1) == 0)
        def _init():
            h_sc[...] = h0_ref[...]               # padded lanes of h0 are zero

        def step(i, carry):
            h_new = jnp.dot(h_sc[...].astype(wh_ref.dtype), wh_ref[...],
                            preferred_element_type=jnp.float32) + pre_ref[i]
            h_sc[...] = h_new                     # padded lanes stay exactly 0
            hid_ref[i] = h_new                    # lane-dense (bt, 128) f32 store
            return carry

        lax.fori_loop(0, tt_sz, step, 0, unroll=True)

    hid_pad = pl.pallas_call(
        kernel,
        grid=(nb, nt),
        in_specs=[
            pl.BlockSpec((tt_sz, bt, H_pad), lambda b, t: (t, b, 0)),  # pre: streams over time tiles
            pl.BlockSpec((bt, H_pad), lambda b, t: (b, 0)),            # h0: resident per batch tile
            pl.BlockSpec((H_pad, H_pad), lambda b, t: (0, 0)),         # W_h: resident for whole sequence
        ],
        out_specs=pl.BlockSpec((tt_sz, bt, H_pad), lambda b, t: (t, b, 0)),
        out_shape=jax.ShapeDtypeStruct((T_pad, B_pad, H_pad), jnp.float32),
        scratch_shapes=[pltpu.VMEM((bt, H_pad), jnp.float32)],         # carried hidden state
        compiler_params=pltpu.CompilerParams(
            dimension_semantics=("parallel", "arbitrary"),
            vmem_limit_bytes=32 * 1024 * 1024),
    )(pre, h0_p, prepped["w_h"])

    # ---- hoisted h2o projection over all (t, b) at once ---------------------
    hid = hid_pad[:T]
    out = _matmul_bias(hid.reshape(T * B_pad, H_pad),
                       prepped["w_h2o"], prepped["b_h2o"]).reshape(T, B_pad, O_pad)

    # Strip batch / lane padding back to the logical widths.
    return hid[:, :B, :H], out[:, :B, :O]


def rnn_reference(data_seq, h0, params):
    """Pure-JAX reference: the PyTorch forward applied step by step."""
    def step(h, x):
        cat = jnp.concatenate([x, h], axis=1)
        h_new = cat @ params["w_i2h"].T + params["b_i2h"]
        out = h_new @ params["w_h2o"].T + params["b_h2o"]
        return h_new, (h_new, out)

    _, (hs, outs) = jax.lax.scan(step, h0, data_seq)
    return hs, outs


if __name__ == "__main__":
    # Shapes matching the tutorial module: RNN(data_size=50, hidden=20, output=10),
    # batch_size=10, run over a short sequence of T=10 steps.
    T, batch, data_size, hidden_size, output_size = 10, 10, 50, 20, 10

    key = jax.random.PRNGKey(0)
    kp, kd = jax.random.split(key)
    params = init_params(kp, data_size, hidden_size, output_size)

    data_seq = jax.random.normal(kd, (T, batch, data_size), jnp.float32)
    h0 = jnp.zeros((batch, hidden_size), jnp.float32)

    ref_hid, ref_out = rnn_reference(data_seq, h0, params)

    # f32 MXU-operand path (tight check).
    prepped_f32 = prepare_params(params, data_size, compute_dtype=jnp.float32)
    hid, out = rnn_forward_seq(data_seq, h0, prepped_f32)
    jax.block_until_ready((hid, out))
    assert hid.shape == (T, batch, hidden_size) and out.shape == (T, batch, output_size)
    assert jnp.allclose(hid, ref_hid, atol=1e-3, rtol=1e-3)
    assert jnp.allclose(out, ref_out, atol=1e-3, rtol=1e-3)

    # bf16 MXU-operand path (f32 recurrent state / f32 accumulation), loose check.
    # TODO(synk): bf16 recurrent error compounds with T; re-validate tolerance for long sequences.
    prepped_bf16 = prepare_params(params, data_size, compute_dtype=jnp.bfloat16)
    hid_bf, out_bf = rnn_forward_seq(data_seq, h0, prepped_bf16)
    jax.block_until_ready((hid_bf, out_bf))
    assert jnp.allclose(hid_bf, ref_hid, atol=5e-2, rtol=5e-2)
    assert jnp.allclose(out_bf, ref_out, atol=5e-2, rtol=5e-2)

    print("KERNEL_OK")
</pallas_src>

<mosaic_0001>
module attributes {stable_mosaic.version = 11 : i64} {
  func.func @kernel(%arg0: i32, %arg1: memref<128x128xf32, #tpu.memory_space<vmem>>, %arg2: memref<128x128xf32, #tpu.memory_space<vmem>>, %arg3: memref<1x128xf32, #tpu.memory_space<vmem>>, %arg4: memref<128x128xf32, #tpu.memory_space<vmem>>) attributes {dimension_semantics = [#tpu.dimension_semantics<parallel>], iteration_bounds = array<i64: 2>, scalar_prefetch = 0 : i64, scratch_operands = 0 : i64, tpu.core_type = #tpu.core_type<tc>, window_params = [{transform_indices = @transform_0, window_bounds = array<i64: 128, 128>}, {pipeline_mode = #tpu.pipeline_mode<synchronous>, transform_indices = @transform_1, window_bounds = array<i64: 128, 128>}, {pipeline_mode = #tpu.pipeline_mode<synchronous>, transform_indices = @transform_2, window_bounds = array<i64: 1, 128>}, {transform_indices = @transform_3, window_bounds = array<i64: 128, 128>}]} {
    %c0 = arith.constant 0 : index
    %c0_0 = arith.constant 0 : index
    %0 = vector.load %arg1[%c0, %c0_0] : memref<128x128xf32, #tpu.memory_space<vmem>>, vector<128x128xf32>
    %c0_1 = arith.constant 0 : index
    %c0_2 = arith.constant 0 : index
    %1 = vector.load %arg2[%c0_1, %c0_2] : memref<128x128xf32, #tpu.memory_space<vmem>>, vector<128x128xf32>
    %cst = arith.constant dense<0.000000e+00> : vector<128x128xf32>
    %2 = tpu.matmul %0, %1, %cst {dimension_numbers = #tpu.dot_dimension_numbers<[1], [0], [0], [1], [0, 0, 1, 1], [], []>} : vector<128x128xf32>, vector<128x128xf32>, vector<128x128xf32> -> vector<128x128xf32>
    %c0_3 = arith.constant 0 : index
    %c0_4 = arith.constant 0 : index
    %3 = vector.load %arg3[%c0_3, %c0_4] : memref<1x128xf32, #tpu.memory_space<vmem>>, vector<1x128xf32>
    %4 = vector.broadcast %3 : vector<1x128xf32> to vector<128x128xf32>
    %5 = arith.addf %2, %4 : vector<128x128xf32>
    %c0_5 = arith.constant 0 : index
    %c0_6 = arith.constant 0 : index
    %6 = vector.load %arg4[%c0_5, %c0_6] : memref<128x128xf32, #tpu.memory_space<vmem>>, vector<128x128xf32>
    tpu.vector_store %arg4[%c0_5, %c0_6], %5 {strides = array<i32>} : memref<128x128xf32, #tpu.memory_space<vmem>>, vector<128x128xf32>,
    return
  }
  func.func @transform_0(%arg0: i32) -> (i32, i32) {
    %c0_i32 = arith.constant 0 : i32
    %c0_i32_0 = arith.constant 0 : i32
    return %arg0, %c0_i32 : i32, i32
  }
  func.func @transform_1(%arg0: i32) -> (i32, i32) {
    %c0_i32 = arith.constant 0 : i32
    %c0_i32_0 = arith.constant 0 : i32
    %c0_i32_1 = arith.constant 0 : i32
    return %c0_i32, %c0_i32_0 : i32, i32
  }
  func.func @transform_2(%arg0: i32) -> (i32, i32) {
    %c0_i32 = arith.constant 0 : i32
    %c0_i32_0 = arith.constant 0 : i32
    %c0_i32_1 = arith.constant 0 : i32
    return %c0_i32, %c0_i32_0 : i32, i32
  }
  func.func @transform_3(%arg0: i32) -> (i32, i32) {
    %c0_i32 = arith.constant 0 : i32
    %c0_i32_0 = arith.constant 0 : i32
    return %arg0, %c0_i32 : i32, i32
  }
}

</mosaic_0001>

<llo_original>
// kernel: tpu_custom_call.1
$region0: #{tpu_custom_call.1}
  #allocation0 [shape = 'u32[]', space=smem, size = 0x4, offset = 0x4, fixed_abs, tag = 'smem constant byte address 0x4 - core index']
  #allocation1 [shape = 'u32[72,128]{1,0:T(1,128)}', space=vmem, size = 0x9000, scoped, tag = 'internal scratch']
  %s0 = inlined_call_operand.hbm [shape: f32[256,128], index: 0, kind: input, shape index: {}]
  %s1 = inlined_call_operand.hbm [shape: f32[128,128], index: 1, kind: input, shape index: {}]
  %s2 = inlined_call_operand.vmem [shape: f32[1,128], index: 2, kind: input, shape index: {}]
  %s3 = inlined_call_operand.hbm [shape: f32[256,128], index: 3, kind: output, shape index: {}]
  %s4 = sld [smem:[#allocation0]]
  $region53: #{tpu_custom_call.1} parent=0
    _
  %s6 = ssub.s32 1, %s4
  %s7 = scalar_select 0, %s6, %s4
  $region1: #{tpu_custom_call.1} parent=0
    #allocation2 [shape = 'u8[131072]{0}', space=vmem, size = 0x20000, scoped, tag = 'input window, operand 0']
    #allocation3 [shape = 's32[2]{0}', space=sflag, size = 0x8, scoped, tag = 'scoped memory for tpu_custom_call.1']
    #allocation4 [shape = 's32[2]{0}', space=sflag, size = 0x8, scoped, tag = 'scoped memory for tpu_custom_call.1']
    #allocation5 [shape = 'u8[65536]{0}', space=vmem, size = 0x10000, scoped, tag = 'input window, operand 1, single buffered']
    #allocation6 [shape = 's32[1]{0}', space=sflag, size = 0x4, scoped, tag = 'scoped memory for tpu_custom_call.1']
    #allocation7 [shape = 'u8[131072]{0}', space=vmem, size = 0x20000, scoped, tag = 'output window, operand 0']
    %8 = vsyncpa [#allocation3], 0
    %s9 = scalar_lea.sflag [#allocation3], 1
    %10 = vsyncpa %s9, 0
    %11 = vsyncpa [#allocation6], 0
    %12 = vsyncpa [#allocation4], 0
    %s13 = scalar_lea.sflag [#allocation4], 1
    %14 = vsyncpa %s13, 0
    loop: start=0, step=1, limit=4
    $region2: #{tpu_custom_call.1} parent=1 // loop_pre_header
      _
    $region3: #{tpu_custom_call.1} parent=1 // loop_header
      %s16 = sphi 0, %s20
      %p17 = scmp.ge.s32.totalorder %s16, 4
      %s26 = sphi 0, %s28
      %s29 = sphi 0, %s26
      %s30 = sphi 0, %s29
      %s46 = sphi 0, %s30
      %s50 = sphi 0, %s50
      %s52 = sphi 0, %s50
      %s53 = sphi 0, %s52
      %s67 = sphi 0, %s53
      %s71 = sphi 0, %s71
      %s73 = sphi 0, %s71
      %s74 = sphi 0, %s73
      %s88 = sphi 0, %s74
      %s94 = sphi 0, %s96
      %s97 = sphi 0, %s94
      %s98 = sphi 0, %s97
      %s114 = sphi 0, %s98
    $region4: #{tpu_custom_call.1} parent=1 // loop_header_branch
      %19 = sbr.rel (%p17) target = $region8
    $region5: #{tpu_custom_call.1} parent=1 // loop_body
      %s21 = ssub.s32 %s16, 1
      %s22 = ssub.s32 %s16, 2
      %s23 = sadd.s32 %s16, 1
      %s24 = ssub.s32 %s16, %s23
      %p25 = scmp.eq.s32.totalorder %s24, 0
      %s27 = sadd.s32 %s26, 1
      %s28 = scalar_select %p25, %s26, %s27
      %p31 = pneg %p25
      %p32 = scmp.eq.s32.totalorder %s16, 1
      %p33 = por %p31, %p32
      %p34 = scmp.ne.s32.totalorder %s26, %s29
      %p35 = scmp.eq.s32.totalorder %s16, 0
      %p36 = por %p34, %p35
      %p37 = scmp.ne.s32.totalorder %s26, %s29
      %p38 = scmp.eq.s32.totalorder %s21, 1
      %p39 = por %p37, %p38
      %p40 = scmp.ne.s32.totalorder %s29, %s30
      %p41 = scmp.eq.s32.totalorder %s21, 0
      %p42 = por %p40, %p41
      %p43 = scmp.ne.s32.totalorder %s29, %s30
      %p44 = scmp.eq.s32.totalorder %s22, 1
      %p45 = por %p43, %p44
      %p47 = scmp.ne.s32.totalorder %s30, %s46
      %p48 = scmp.eq.s32.totalorder %s22, 0
      %p49 = por %p47, %p48
      %s51 = sadd.s32 %s50, 1
      %p54 = scmp.eq.s32.totalorder %s16, 1
      %p55 = scmp.ne.s32.totalorder %s50, %s52
      %p56 = scmp.eq.s32.totalorder %s16, 0
      %p57 = por %p55, %p56
      %p58 = scmp.ne.s32.totalorder %s50, %s52
      %p59 = scmp.eq.s32.totalorder %s21, 1
      %p60 = por %p58, %p59
      %p61 = scmp.ne.s32.totalorder %s52, %s53
      %p62 = scmp.eq.s32.totalorder %s21, 0
      %p63 = por %p61, %p62
      %p64 = scmp.ne.s32.totalorder %s52, %s53
      %p65 = scmp.eq.s32.totalorder %s22, 1
      %p66 = por %p64, %p65
      %p68 = scmp.ne.s32.totalorder %s53, %s67
      %p69 = scmp.eq.s32.totalorder %s22, 0
      %p70 = por %p68, %p69
      %s72 = sadd.s32 %s71, 1
      %p75 = scmp.eq.s32.totalorder %s16, 1
      %p76 = scmp.ne.s32.totalorder %s71, %s73
      %p77 = scmp.eq.s32.totalorder %s16, 0
      %p78 = por %p76, %p77
      %p79 = scmp.ne.s32.totalorder %s71, %s73
      %p80 = scmp.eq.s32.totalorder %s21, 1
      %p81 = por %p79, %p80
      %p82 = scmp.ne.s32.totalorder %s73, %s74
      %p83 = scmp.eq.s32.totalorder %s21, 0
      %p84 = por %p82, %p83
      %p85 = scmp.ne.s32.totalorder %s73, %s74
      %p86 = scmp.eq.s32.totalorder %s22, 1
      %p87 = por %p85, %p86
      %p89 = scmp.ne.s32.totalorder %s74, %s88
      %p90 = scmp.eq.s32.totalorder %s22, 0
      %p91 = por %p89, %p90
      %s92 = ssub.s32 %s16, %s23
      %p93 = scmp.eq.s32.totalorder %s92, 0
      %s95 = sadd.s32 %s94, 1
      %s96 = scalar_select %p93, %s94, %s95
      %p99 = pneg %p93
      %p100 = scmp.eq.s32.totalorder %s16, 1
      %p101 = por %p99, %p100
      %p102 = scmp.ne.s32.totalorder %s94, %s97
      %p103 = scmp.eq.s32.totalorder %s16, 0
      %p104 = por %p102, %p103
      %p105 = scmp.ne.s32.totalorder %s94, %s97
      %p106 = scmp.eq.s32.totalorder %s21, 1
      %p107 = por %p105, %p106
      %p108 = scmp.ne.s32.totalorder %s97, %s98
      %p109 = scmp.eq.s32.totalorder %s21, 0
      %p110 = por %p108, %p109
      %p111 = scmp.ne.s32.totalorder %s97, %s98
      %p112 = scmp.eq.s32.totalorder %s22, 1
      %p113 = por %p111, %p112
      %p115 = scmp.ne.s32.totalorder %s98, %s114
      %p116 = scmp.eq.s32.totalorder %s22, 0
      %p117 = por %p115, %p116
      %p118 = scmp.le.s32.totalorder 1, %s16
      %p119 = scmp.lt.s32.totalorder %s16, 3
      %p120 = pnand %p118, %p119
      %p121 = pneg %p120
      // Predicated region
      $region9: #{tpu_custom_call.1} parent=5 // pred_check
        _
      $region10: #{tpu_custom_call.1} parent=5 // pred_check_branch
        %123 = sbr.rel (%p120) target = $region12
      $region11: #{tpu_custom_call.1} parent=5 // pred_region
        %s124 = ssub.s32 %s16, 1
        // Predicated region
        $region13: #{tpu_custom_call.1} parent=11 // pred_check
          %p125 = pneg %p63
        $region14: #{tpu_custom_call.1} parent=11 // pred_check_branch
          %127 = sbr.rel (%p125) target = $region16
        $region15: #{tpu_custom_call.1} parent=11 // pred_region
          %129 = vsyncadd [#allocation6], 0
          %s130 = sshll.u32 %s1, 4
          %s131 = int_to_ptr.hbm [resolvable:$true] %s130
          %s132 = sshll.u32 [#allocation5], 4
          %s133 = int_to_ptr.vmem [resolvable:$true] %s132
          %138 = dma.hbm_to_vmem [thread:$0]  %s131, 2048, %s133, [#allocation6], 128, 128, 8
        $region16: #{tpu_custom_call.1} parent=11 // pred_fallthru
          _
        // Predicated region
        $region17: #{tpu_custom_call.1} parent=11 // pred_check
          %p139 = pneg %p84
        $region18: #{tpu_custom_call.1} parent=11 // pred_check_branch
          %141 = sbr.rel (%p139) target = $region20
        $region19: #{tpu_custom_call.1} parent=11 // pred_region
          _
        $region20: #{tpu_custom_call.1} parent=11 // pred_fallthru
          _
      $region12: #{tpu_custom_call.1} parent=5 // pred_fallthru
        _
      %p142 = scmp.lt.s32.totalorder %s16, 2
      // Predicated region
      $region21: #{tpu_custom_call.1} parent=5 // pred_check
        %p143 = pneg %p142
      $region22: #{tpu_custom_call.1} parent=5 // pred_check_branch
        %145 = sbr.rel (%p143) target = $region24
      $region23: #{tpu_custom_call.1} parent=5 // pred_region
        // Predicated region
        $region25: #{tpu_custom_call.1} parent=23 // pred_check
          %p146 = pneg %p36
        $region26: #{tpu_custom_call.1} parent=23 // pred_check_branch
          %148 = sbr.rel (%p146) target = $region28
        $region27: #{tpu_custom_call.1} parent=23 // pred_region
          %s149 = sand.u32 %s26, 1
          %s150 = scalar_lea.sflag [#allocation3], %s149
          %s151 = sand.u32 %s26, 1
          %s152 = smul.addr %s151, 128
          %s153 = scalar_lea.vmem [#allocation2], %s152
          %s154 = smul.u32 16, %s16
          %156 = vsyncadd %s150, 0
          %s157 = smul.addr %s154, 8
          %s158 = scalar_lea.hbm %s0, %s157
          %s159 = sshll.u32 %s158, 4
          %s160 = int_to_ptr.hbm [resolvable:$true] %s159
          %s161 = sshll.u32 %s153, 4
          %s162 = int_to_ptr.vmem [resolvable:$true] %s161
          %167 = dma.hbm_to_vmem [thread:$0]  %s160, 2048, %s162, %s150, 128, 128, 8
        $region28: #{tpu_custom_call.1} parent=23 // pred_fallthru
          _
      $region24: #{tpu_custom_call.1} parent=5 // pred_fallthru
        _
      %p168 = scmp.le.s32.totalorder 1, %s16
      %p169 = scmp.lt.s32.totalorder %s16, 3
      %p170 = pnand %p168, %p169
      %p171 = pneg %p170
      // Predicated region
      $region29: #{tpu_custom_call.1} parent=5 // pred_check
        _
      $region30: #{tpu_custom_call.1} parent=5 // pred_check_branch
        %173 = sbr.rel (%p170) target = $region32
      $region31: #{tpu_custom_call.1} parent=5 // pred_region
        %s174 = ssub.s32 %s16, 1
        %s175 = sand.u32 %s29, 1
        %s176 = scalar_lea.sflag [#allocation3], %s175
        %s177 = sand.u32 %s29, 1
        %s178 = smul.addr %s177, 128
        %s179 = scalar_lea.vmem [#allocation2], %s178
        // Predicated region
        $region33: #{tpu_custom_call.1} parent=31 // pred_check
          %p180 = pneg %p42
        $region34: #{tpu_custom_call.1} parent=31 // pred_check_branch
          %182 = sbr.rel (%p180) target = $region36
        $region35: #{tpu_custom_call.1} parent=31 // pred_region
          %184 = dma.done %s176, 2048
        $region36: #{tpu_custom_call.1} parent=31 // pred_fallthru
          _
        // Predicated region
        $region37: #{tpu_custom_call.1} parent=31 // pred_check
          %p185 = pneg %p63
        $region38: #{tpu_custom_call.1} parent=31 // pred_check_branch
          %187 = sbr.rel (%p185) target = $region40
        $region39: #{tpu_custom_call.1} parent=31 // pred_region
          %189 = dma.done [#allocation6], 2048
        $region40: #{tpu_custom_call.1} parent=31 // pred_fallthru
          _
        %s190 = sand.u32 %s29, 1
        %s191 = scalar_lea.sflag [#allocation3], %s190
        %s192 = sand.u32 %s29, 1
        %s193 = smul.addr %s192, 128
        %s194 = scalar_lea.vmem [#allocation2], %s193
        %p195 = pneg %p42
        %p196 = pneg %p39
        %p197 = pneg %p63
        %p198 = pneg %p60
        %p199 = pneg %p84
        %p200 = pneg %p81
        %p201 = pneg %p110
        %p202 = pneg %p107
        %s203 = sand.u32 %s97, 1
        %s204 = scalar_lea.sflag [#allocation4], %s203
        %s205 = sand.u32 %s97, 1
        %s206 = smul.addr %s205, 128
        %s207 = scalar_lea.vmem [#allocation7], %s206
        %s208 = smul.u32 16, %s21
        %s209 = smul.u32 16, %s21
        %v210 = vld [vmem:[%s179] sm:$0xff]
        %v211 = vld [vmem:[%s179 + $0x8] sm:$0xff]
        %v212 = vld [vmem:[%s179 + $0x10] sm:$0xff]
        %v213 = vld [vmem:[%s179 + $0x18] sm:$0xff]
        %v214 = vld [vmem:[%s179 + $0x20] sm:$0xff]
        %v215 = vld [vmem:[%s179 + $0x28] sm:$0xff]
        %v216 = vld [vmem:[%s179 + $0x30] sm:$0xff]
        %v217 = vld [vmem:[%s179 + $0x38] sm:$0xff]
        %v218 = vld [vmem:[%s179 + $0x40] sm:$0xff]
        %v219 = vld [vmem:[%s179 + $0x48] sm:$0xff]
        %v220 = vld [vmem:[%s179 + $0x50] sm:$0xff]
        %v221 = vld [vmem:[%s179 + $0x58] sm:$0xff]
        %v222 = vld [vmem:[%s179 + $0x60] sm:$0xff]
        %v223 = vld [vmem:[%s179 + $0x68] sm:$0xff]
        %v224 = vld [vmem:[%s179 + $0x70] sm:$0xff]
        %v225 = vld [vmem:[%s179 + $0x78] sm:$0xff]
        %v226 = vld [vmem:[#allocation5] sm:$0xff]
        %v227 = vld [vmem:[#allocation5 + $0x8] sm:$0xff]
        %v228 = vld [vmem:[#allocation5 + $0x10] sm:$0xff]
        %v229 = vld [vmem:[#allocation5 + $0x18] sm:$0xff]
        %v230 = vld [vmem:[#allocation5 + $0x20] sm:$0xff]
        %v231 = vld [vmem:[#allocation5 + $0x28] sm:$0xff]
        %v232 = vld [vmem:[#allocation5 + $0x30] sm:$0xff]
        %v233 = vld [vmem:[#allocation5 + $0x38] sm:$0xff]
        %v234 = vld [vmem:[#allocation5 + $0x40] sm:$0xff]
        %v235 = vld [vmem:[#allocation5 + $0x48] sm:$0xff]
        %v236 = vld [vmem:[#allocation5 + $0x50] sm:$0xff]
        %v237 = vld [vmem:[#allocation5 + $0x58] sm:$0xff]
        %v238 = vld [vmem:[#allocation5 + $0x60] sm:$0xff]
        %v239 = vld [vmem:[#allocation5 + $0x68] sm:$0xff]
        %v240 = vld [vmem:[#allocation5 + $0x70] sm:$0xff]
        %v241 = vld [vmem:[#allocation5 + $0x78] sm:$0xff]
        %v242 = vld [vmem:[%s2] sm:$0x1]
        %v244 = vperm.slane %v242, 0
        %246 = vmatpush.msra.mxu0 %v241
        %247 = vmatpush.msra.mxu0 %v240
        %248 = vmatpush.msra.mxu0 %v239
        %249 = vmatpush.msra.mxu0 %v238
        %250 = vmatpush.msra.mxu0 %v237
        %251 = vmatpush.msra.mxu0 %v236
        %252 = vmatpush.msra.mxu0 %v235
        %253 = vmatpush.msra.mxu0 %v234
        %254 = vmatpush.msra.mxu0 %v233
        %255 = vmatpush.msra.mxu0 %v232
        %256 = vmatpush.msra.mxu0 %v231
        %257 = vmatpush.msra.mxu0 %v230
        %258 = vmatpush.msra.mxu0 %v229
        %259 = vmatpush.msra.mxu0 %v228
        %260 = vmatpush.msra.mxu0 %v227
        %261 = vmatpush.msra.mxu0 %v226
        %262 = vmatmul.f32.gmra.mxu0 %v210
        %v263 = vpop.f32.mrf.mxu0
        %v264 = vadd.f32 %v244, %v263
        %265 = vmatmul.f32.gmra.mxu0 %v211
        %v266 = vpop.f32.mrf.mxu0
        %v267 = vadd.f32 %v244, %v266
        %268 = vmatmul.f32.gmra.mxu0 %v212
        %v269 = vpop.f32.mrf.mxu0
        %v270 = vadd.f32 %v244, %v269
        %271 = vmatmul.f32.gmra.mxu0 %v213
        %v272 = vpop.f32.mrf.mxu0
        %v273 = vadd.f32 %v244, %v272
        %274 = vmatmul.f32.gmra.mxu0 %v214
        %v275 = vpop.f32.mrf.mxu0
        %v276 = vadd.f32 %v244, %v275
        %277 = vmatmul.f32.gmra.mxu0 %v215
        %v278 = vpop.f32.mrf.mxu0
        %v279 = vadd.f32 %v244, %v278
        %280 = vmatmul.f32.gmra.mxu0 %v216
        %v281 = vpop.f32.mrf.mxu0
        %v282 = vadd.f32 %v244, %v281
        %283 = vmatmul.f32.gmra.mxu0 %v217
        %v284 = vpop.f32.mrf.mxu0
        %v285 = vadd.f32 %v244, %v284
        %286 = vmatmul.f32.gmra.mxu0 %v218
        %v287 = vpop.f32.mrf.mxu0
        %v288 = vadd.f32 %v244, %v287
        %289 = vmatmul.f32.gmra.mxu0 %v219
        %v290 = vpop.f32.mrf.mxu0
        %v291 = vadd.f32 %v244, %v290
        %292 = vmatmul.f32.gmra.mxu0 %v220
        %v293 = vpop.f32.mrf.mxu0
        %v294 = vadd.f32 %v244, %v293
        %295 = vmatmul.f32.gmra.mxu0 %v221
        %v296 = vpop.f32.mrf.mxu0
        %v297 = vadd.f32 %v244, %v296
        %298 = vmatmul.f32.gmra.mxu0 %v222
        %v299 = vpop.f32.mrf.mxu0
        %v300 = vadd.f32 %v244, %v299
        %301 = vmatmul.f32.gmra.mxu0 %v223
        %v302 = vpop.f32.mrf.mxu0
        %v303 = vadd.f32 %v244, %v302
        %304 = vmatmul.f32.gmra.mxu0 %v224
        %v305 = vpop.f32.mrf.mxu0
        %v306 = vadd.f32 %v244, %v305
        %307 = vmatmul.f32.gmra.mxu0 %v225
        %v308 = vpop.f32.mrf.mxu0
        %v309 = vadd.f32 %v244, %v308
        %310 = vdwg.mxu0
        %311 = vst [vmem:[%s207] sm:$0xff] %v264
        %312 = vst [vmem:[%s207 + $0x8] sm:$0xff] %v267
        %313 = vst [vmem:[%s207 + $0x10] sm:$0xff] %v270
        %314 = vst [vmem:[%s207 + $0x18] sm:$0xff] %v273
        %315 = vst [vmem:[%s207 + $0x20] sm:$0xff] %v276
        %316 = vst [vmem:[%s207 + $0x28] sm:$0xff] %v279
        %317 = vst [vmem:[%s207 + $0x30] sm:$0xff] %v282
        %318 = vst [vmem:[%s207 + $0x38] sm:$0xff] %v285
        %319 = vst [vmem:[%s207 + $0x40] sm:$0xff] %v288
        %320 = vst [vmem:[%s207 + $0x48] sm:$0xff] %v291
        %321 = vst [vmem:[%s207 + $0x50] sm:$0xff] %v294
        %322 = vst [vmem:[%s207 + $0x58] sm:$0xff] %v297
        %323 = vst [vmem:[%s207 + $0x60] sm:$0xff] %v300
        %324 = vst [vmem:[%s207 + $0x68] sm:$0xff] %v303
        %325 = vst [vmem:[%s207 + $0x70] sm:$0xff] %v306
        %326 = vst [vmem:[%s207 + $0x78] sm:$0xff] %v309
        %s327 = sand.u32 %s97, 1
        %s328 = scalar_lea.sflag [#allocation4], %s327
        %s329 = sand.u32 %s97, 1
        %s330 = smul.addr %s329, 128
        %s331 = scalar_lea.vmem [#allocation7], %s330
        // Predicated region
        $region41: #{tpu_custom_call.1} parent=31 // pred_check
          %p332 = pneg %p107
        $region42: #{tpu_custom_call.1} parent=31 // pred_check_branch
          %334 = sbr.rel (%p332) target = $region44
        $region43: #{tpu_custom_call.1} parent=31 // pred_region
          %s335 = smul.u32 16, %s21
          %337 = vsyncadd %s328, 0
          %s338 = smul.addr %s335, 8
          %s339 = scalar_lea.hbm %s3, %s338
          %s340 = sshll.u32 %s331, 4
          %s341 = int_to_ptr.vmem [resolvable:$true] %s340
          %s342 = sshll.u32 %s339, 4
          %s343 = int_to_ptr.hbm [resolvable:$true] %s342
          %348 = dma.vmem_to_hbm [thread:$0]  %s341, 2048, %s343, %s328, 128, 128, 8
        $region44: #{tpu_custom_call.1} parent=31 // pred_fallthru
          _
      $region32: #{tpu_custom_call.1} parent=5 // pred_fallthru
        _
      %p349 = scmp.le.s32.totalorder 2, %s16
      // Predicated region
      $region45: #{tpu_custom_call.1} parent=5 // pred_check
        %p350 = pneg %p349
      $region46: #{tpu_custom_call.1} parent=5 // pred_check_branch
        %352 = sbr.rel (%p350) target = $region48
      $region47: #{tpu_custom_call.1} parent=5 // pred_region
        %s353 = ssub.s32 %s16, 2
        // Predicated region
        $region49: #{tpu_custom_call.1} parent=47 // pred_check
          %p354 = pneg %p113
        $region50: #{tpu_custom_call.1} parent=47 // pred_check_branch
          %356 = sbr.rel (%p354) target = $region52
        $region51: #{tpu_custom_call.1} parent=47 // pred_region
          %s357 = sand.u32 %s98, 1
          %s358 = scalar_lea.sflag [#allocation4], %s357
          %s359 = sand.u32 %s98, 1
          %s360 = smul.addr %s359, 128
          %s361 = scalar_lea.vmem [#allocation7], %s360
          %363 = dma.done %s358, 2048
        $region52: #{tpu_custom_call.1} parent=47 // pred_fallthru
          _
      $region48: #{tpu_custom_call.1} parent=5 // pred_fallthru
        _
    $region6: #{tpu_custom_call.1} parent=1 // loop_footer
      %s20 = sadd.s32 1, %s16
    $region7: #{tpu_custom_call.1} parent=1 // loop_footer_branch
      %15 = sbr.rel target = $region3
    $region8: #{tpu_custom_call.1} parent=1 // loop_exit
      _
    %364 = vsyncpa [#allocation3], 1
    %s365 = scalar_lea.sflag [#allocation3], 1
    %366 = vsyncpa %s365, 1
    %367 = vsyncpa [#allocation6], 1
    %368 = vsyncpa [#allocation4], 1
    %s369 = scalar_lea.sflag [#allocation4], 1
    %370 = vsyncpa %s369, 1

</llo_original>
